<compile_context>
chip_gen: v6e
topology: v6e:2x2x1
jax: 0.10.0
libtpu: 0.0.40
codegen_flags: <defaults>
</compile_context>

<pallas_src>
import functools

import jax
import jax.numpy as jnp
from jax.experimental import pallas as pl
from jax.experimental.pallas import tpu as pltpu

LANE = 128


def _round_up(x, m):
    return ((x + m - 1) // m) * m


@functools.lru_cache(maxsize=1)
def _min_grid_steps():
    # v7x has 2 TensorCores/chip: aim for >=4 "parallel" steps (2 per core) so
    # each core can overlap the next row-tile DMA with compute.  v5e/v6e have a
    # single TensorCore: one big step avoids ~0.35us/step grid overhead.
    try:
        kind = jax.devices()[0].device_kind.lower()
    except Exception:
        return 1
    return 4 if "v7" in kind else 1


def _pick_tile(n, tile_max):
    steps = _min_grid_steps()
    t = _round_up(max(1, -(-n // steps)), 8)
    return max(8, min(tile_max, t))


def _vmem_limit(nbytes):
    # 2x headroom; floor 24 MiB / cap 64 MiB keeps it valid on every generation
    # (v5e 16/128 MiB scoped/physical, v6e 32/128, v7x 32/64).
    return int(min(max(2 * int(nbytes) + (2 << 20), 24 << 20), 64 << 20))


# ---------------------------------------------------------------------------
# Kernel 1: fused embedding lookup-and-sum (bf16 one-hot @ bf16 table on MXU)
# ---------------------------------------------------------------------------
def _embedding_sum_kernel(idx_ref, tab_ref, out_ref):
    # idx_ref: (TN, F) int32 | tab_ref: (F*Vp, Hp) bf16 | out_ref: (TN, Hp) f32
    tn, f_num = idx_ref.shape
    k = tab_ref.shape[0]
    vp = k // f_num
    lane = jax.lax.broadcasted_iota(jnp.int32, (tn, vp), 1)
    # Build the one-hot directly in bf16, one (TN, Vp) block per feature, and
    # concatenate along lanes (Vp is a multiple of 128).  bf16 0/1 is exact.
    blocks = [(lane == idx_ref[:, f:f + 1]).astype(jnp.bfloat16) for f in range(f_num)]
    onehot = blocks[0] if f_num == 1 else jnp.concatenate(blocks, axis=1)
    out_ref[...] = jnp.dot(onehot, tab_ref[...], preferred_element_type=jnp.float32)


def pack_embedding_tables(tables):
    """(F, V, H) f32 -> padded (F*Vp, Hp) bf16 table.  Done ONCE at init."""
    tables = jnp.asarray(tables, jnp.float32)
    f_num, v, h = tables.shape
    vp = _round_up(max(v, LANE), LANE)
    hp = _round_up(max(h, LANE), LANE)          # lane-dense output stores
    tab = jnp.zeros((f_num, vp, hp), jnp.float32).at[:, :v, :h].set(tables)
    tab = tab.reshape(f_num * vp, hp).astype(jnp.bfloat16)
    return {"table": tab, "F": f_num, "V": v, "H": h, "Hp": hp}


def embedding_sum_padded(packed, idx_p, *, tile):
    """sum_f table[f][idx_p[:, f]] for row-padded idx_p -> (Np, Hp) float32.

    NOTE: out-of-range indices (>= V) silently select a zero padded row
    (torch.nn.Embedding would raise).
    """
    tab = packed["table"]
    f_num, hp = packed["F"], packed["Hp"]
    np_, fi = idx_p.shape
    assert fi == f_num and np_ % tile == 0
    k = tab.shape[0]
    vmem = _vmem_limit(tab.size * 2 + 2 * tile * hp * 4 + tile * k * 2
                       + 2 * tile * f_num * 4)
    return pl.pallas_call(
        _embedding_sum_kernel,
        out_shape=jax.ShapeDtypeStruct((np_, hp), jnp.float32),
        grid_spec=pltpu.PrefetchScalarGridSpec(
            num_scalar_prefetch=0,
            grid=(np_ // tile,),
            in_specs=[
                pl.BlockSpec((tile, f_num), lambda i: (i, 0)),
                # constant block index -> resident table; Buffered(1) avoids a
                # second (useless) VMEM copy of it.
                pl.BlockSpec((k, hp), lambda i: (0, 0),
                             pipeline_mode=pl.Buffered(1)),
            ],
            out_specs=pl.BlockSpec((tile, hp), lambda i: (i, 0)),
        ),
        compiler_params=pltpu.CompilerParams(
            dimension_semantics=("parallel",), vmem_limit_bytes=vmem),
    )(idx_p, tab)


# ---------------------------------------------------------------------------
# Kernel 2: fused GINE MLP
#   (1+eps)*x + aggr -> Linear(H,2H) -> tanh -> Linear(2H,H) -> tanh
# ---------------------------------------------------------------------------
def _gine_mlp_kernel(scale_ref, x_ref, a_ref, w1_ref, b1_ref, w2_ref, b2_ref, o_ref):
    z = scale_ref[0] * x_ref[...] + a_ref[...]
    h = jnp.dot(z.astype(jnp.bfloat16), w1_ref[...],
                preferred_element_type=jnp.float32) + b1_ref[...]
    h = jnp.tanh(h)                            # (tile, 2Hp) stays in VMEM/vregs
    y = jnp.dot(h.astype(jnp.bfloat16), w2_ref[...],
                preferred_element_type=jnp.float32) + b2_ref[...]
    o_ref[...] = jnp.tanh(y)


def gine_mlp(scale, x_p, aggr_p, w1, b1, w2, b2, *, tile):
    np_, hp = x_p.shape
    h2p = w1.shape[1]
    assert np_ % tile == 0
    const = pl.Buffered(1)
    vmem = _vmem_limit(w1.size * 2 + w2.size * 2 + (b1.size + b2.size) * 4
                       + 6 * tile * hp * 4 + 2 * tile * h2p * 4)
    return pl.pallas_call(
        _gine_mlp_kernel,
        out_shape=jax.ShapeDtypeStruct((np_, hp), jnp.float32),
        grid_spec=pltpu.PrefetchScalarGridSpec(
            num_scalar_prefetch=0,
            grid=(np_ // tile,),
            in_specs=[
                pl.BlockSpec(memory_space=pltpu.MemorySpace.SMEM),  # (1,) scale = 1+eps
                pl.BlockSpec((tile, hp), lambda i: (i, 0)),         # x
                pl.BlockSpec((tile, hp), lambda i: (i, 0)),         # aggr
                pl.BlockSpec((hp, h2p), lambda i: (0, 0), pipeline_mode=const),
                pl.BlockSpec((1, h2p), lambda i: (0, 0), pipeline_mode=const),
                pl.BlockSpec((h2p, hp), lambda i: (0, 0), pipeline_mode=const),
                pl.BlockSpec((1, hp), lambda i: (0, 0), pipeline_mode=const),
            ],
            out_specs=pl.BlockSpec((tile, hp), lambda i: (i, 0)),
        ),
        compiler_params=pltpu.CompilerParams(
            dimension_semantics=("parallel",), vmem_limit_bytes=vmem),
    )(scale, x_p, aggr_p, w1, b1, w2, b2)


# ---------------------------------------------------------------------------
# Kernel 3: tanh(x @ W + b)  (final Linear + Tanh head)
# ---------------------------------------------------------------------------
def _dense_tanh_kernel(x_ref, w_ref, b_ref, o_ref):
    y = jnp.dot(x_ref[...].astype(jnp.bfloat16), w_ref[...],
                preferred_element_type=jnp.float32)
    o_ref[...] = jnp.tanh(y + b_ref[...])


def dense_tanh(x, w, b, *, tile_max=512):
    # x: (N, Dinp) f32 (lane-padded) | w: (Dinp, Doutp) bf16 | b: (1, Doutp) f32
    n, dip = x.shape
    dop = w.shape[1]
    tile = _pick_tile(n, tile_max)
    np_ = _round_up(n, tile)
    x_p = x if np_ == n else jnp.zeros((np_, dip), jnp.float32).at[:n].set(x)
    const = pl.Buffered(1)
    vmem = _vmem_limit(w.size * 2 + b.size * 4 + 2 * tile * (dip + dop) * 4)
    out = pl.pallas_call(
        _dense_tanh_kernel,
        out_shape=jax.ShapeDtypeStruct((np_, dop), jnp.float32),
        grid_spec=pltpu.PrefetchScalarGridSpec(
            num_scalar_prefetch=0,
            grid=(np_ // tile,),
            in_specs=[
                pl.BlockSpec((tile, dip), lambda i: (i, 0)),
                pl.BlockSpec((dip, dop), lambda i: (0, 0), pipeline_mode=const),
                pl.BlockSpec((1, dop), lambda i: (0, 0), pipeline_mode=const),
            ],
            out_specs=pl.BlockSpec((tile, dop), lambda i: (i, 0)),
        ),
        compiler_params=pltpu.CompilerParams(
            dimension_semantics=("parallel",), vmem_limit_bytes=vmem),
    )(x_p, w, b)
    return out[:n]


# ---------------------------------------------------------------------------
# KnowMemSpace parameters / forward
# ---------------------------------------------------------------------------
def _segment_sum(data, segment_ids, num_segments):
    shape = (num_segments,) + data.shape[1:]
    return jnp.zeros(shape, data.dtype).at[segment_ids].add(data)


def init_params(key, g_dim, concept_num, num_edge_types, f_num, num_layers):
    keys = iter(jax.random.split(key, 8 + 6 * num_layers))

    def nrm(shape, scale=1.0):
        return scale * jax.random.normal(next(keys), shape, dtype=jnp.float32)

    return {
        "concept_emb": nrm((1, concept_num, g_dim)),                      # CustomizedEmbedding
        "edge_emb": [nrm((f_num, num_edge_types, g_dim)) for _ in range(num_layers)],
        "eps": [jnp.float32(0.0) for _ in range(num_layers)],             # GINEConv eps init 0
        "W1": [nrm((g_dim, 2 * g_dim), 1.0 / jnp.sqrt(g_dim)) for _ in range(num_layers)],
        "b1": [nrm((2 * g_dim,), 0.1) for _ in range(num_layers)],
        "W2": [nrm((2 * g_dim, g_dim), 1.0 / jnp.sqrt(2.0 * g_dim)) for _ in range(num_layers)],
        "b2": [nrm((g_dim,), 0.1) for _ in range(num_layers)],
        "W_lin": nrm((g_dim, g_dim), 1.0 / jnp.sqrt(g_dim)),
        "b_lin": nrm((g_dim,), 0.1),
    }


def _pack_dense(w, b):
    d_in, d_out = w.shape
    dip = _round_up(max(d_in, LANE), LANE)
    dop = _round_up(max(d_out, LANE), LANE)
    w_p = jnp.zeros((dip, dop), jnp.float32).at[:d_in, :d_out].set(w).astype(jnp.bfloat16)
    b_p = jnp.zeros((1, dop), jnp.float32).at[0, :d_out].set(b)
    return w_p, b_p


def pack_params(params):
    # Heavy table/weight padding, reshape and bf16 cast hoisted out of the forward.
    num_layers = len(params["W1"])
    packed = {
        "H": params["concept_emb"].shape[-1],
        "concept_emb_packed": pack_embedding_tables(params["concept_emb"]),
        "edge_emb_packed": [pack_embedding_tables(t) for t in params["edge_emb"]],
        "scale": [jnp.reshape(1.0 + e, (1,)).astype(jnp.float32) for e in params["eps"]],
        "mlp": [],
    }
    for i in range(num_layers):
        w1, b1 = _pack_dense(params["W1"][i], params["b1"][i])
        w2, b2 = _pack_dense(params["W2"][i], params["b2"][i])
        packed["mlp"].append((w1, b1, w2, b2))
    packed["W_lin"], packed["b_lin"] = _pack_dense(params["W_lin"], params["b_lin"])
    return packed


def knowmem_forward(packed, node_ids, edge_index, edge_attr, batch, num_graphs,
                    *, global_pooling=True, node_tile_max=512, edge_tile_max=512):
    h = packed["H"]
    n = node_ids.shape[0]

    # Node activations are carried row-padded (Np) and lane-padded (Hp) end to
    # end; padded rows are only excluded at the final pooling / slice.
    node_tile = _pick_tile(n, node_tile_max)
    np_ = _round_up(n, node_tile)
    f_node = packed["concept_emb_packed"]["F"]
    node_idx_p = jnp.zeros((np_, f_node), jnp.int32)
    node_idx_p = node_idx_p.at[:n].set(node_ids.astype(jnp.int32).reshape(n, -1))
    # data.x.squeeze() -> concept ids.
    # TODO(synk): CustomizedEmbedding's optional concept_in_dim->out_dim MLP
    # projection / contextualized path is not modeled (concept_dim == g_dim here).
    x = embedding_sum_padded(packed["concept_emb_packed"], node_idx_p, tile=node_tile)

    src, dst = edge_index[0], edge_index[1]
    e_num = edge_attr.shape[0]
    edge_tile = _pick_tile(e_num, edge_tile_max)
    ep = _round_up(e_num, edge_tile)
    f_edge = packed["edge_emb_packed"][0]["F"]
    edge_attr = edge_attr.astype(jnp.int32).reshape(e_num, -1)
    edge_idx_p = jnp.zeros((ep, f_edge), jnp.int32).at[:e_num].set(edge_attr)

    for i in range(len(packed["mlp"])):
        # TODO(synk): the torch code overwrites data.edge_attr in place with the
        # (E, H) float embedding after layer 0; we re-encode the raw integer
        # edge types with layer i's encoder (the only reading that type-checks
        # for num_layers > 1).
        # TODO(synk): for very large vocabularies (esp. v7x's 64 MiB VMEM) the
        # resident one-hot table should switch to an HBM table + per-row DMA
        # gather (memory_space=pl.ANY, pl.Element index_map).
        e = embedding_sum_padded(packed["edge_emb_packed"][i], edge_idx_p,
                                 tile=edge_tile)[:e_num]
        # GINEConv (aggr='add'): irregular gather / scatter-add stay in XLA.
        # TODO(synk): fusing relu(x[src] + e) into the edge kernel would save
        # ~2 (E, H) HBM round trips per layer.
        msg = jax.nn.relu(x[src] + e)
        aggr = _segment_sum(msg, dst, np_)
        # Fused: (1+eps)*x + aggr -> Linear(H,2H) -> Tanh -> Linear(2H,H) -> Tanh
        w1, b1, w2, b2 = packed["mlp"][i]
        x = gine_mlp(packed["scale"][i], x, aggr, w1, b1, w2, b2, tile=node_tile)
        # F.dropout(training=False) == identity

    if not global_pooling:
        return dense_tanh(x, packed["W_lin"], packed["b_lin"])[:n, :h]

    # scatter-mean pooling; padded node rows go to a dummy segment (num_graphs)
    # so their non-zero tanh(b) values never contaminate the real graph means.
    batch_p = jnp.full((np_,), num_graphs, jnp.int32).at[:n].set(batch.astype(jnp.int32))
    counts = _segment_sum(jnp.ones((n,), jnp.float32), batch, num_graphs)
    pooled = _segment_sum(x, batch_p, num_graphs + 1)[:num_graphs]
    pooled = pooled / jnp.maximum(counts, 1.0)[:, None]
    out = dense_tanh(pooled, packed["W_lin"], packed["b_lin"])
    return out[:, :h]


# ---------------------------------------------------------------------------
# Pure-JAX reference (mirrors the kernels' bf16 weight storage / matmuls)
# ---------------------------------------------------------------------------
def reference_forward(params, node_ids, edge_index, edge_attr, batch, num_graphs):
    def bf(a):
        return a.astype(jnp.bfloat16)

    def emb_lookup(tab, idx):
        tab = bf(tab).astype(jnp.float32)       # kernel stores bf16 tables
        if idx.ndim == 1:
            idx = idx[:, None]
        out = jnp.zeros((idx.shape[0], tab.shape[-1]), jnp.float32)
        for f in range(tab.shape[0]):
            out = out + jnp.take(tab[f], idx[:, f], axis=0)
        return out

    def dense_bf16(a, w, b):
        # kernels run bf16 x bf16 -> f32 on the MXU
        return jnp.dot(bf(a), bf(w), preferred_element_type=jnp.float32) + b

    x = emb_lookup(params["concept_emb"], node_ids)
    src, dst = edge_index[0], edge_index[1]
    n = x.shape[0]
    for i in range(len(params["edge_emb"])):
        e = emb_lookup(params["edge_emb"][i], edge_attr)
        msg = jax.nn.relu(x[src] + e)
        aggr = _segment_sum(msg, dst, n)
        z = (1.0 + params["eps"][i]) * x + aggr
        h = jnp.tanh(dense_bf16(z, params["W1"][i], params["b1"][i]))
        x = jnp.tanh(dense_bf16(h, params["W2"][i], params["b2"][i]))
    counts = _segment_sum(jnp.ones((n,), jnp.float32), batch, num_graphs)
    pooled = _segment_sum(x, batch, num_graphs) / jnp.maximum(counts, 1.0)[:, None]
    return jnp.tanh(dense_bf16(pooled, params["W_lin"], params["b_lin"]))


if __name__ == "__main__":
    key = jax.random.PRNGKey(0)
    g_dim = 32                 # args.g_dim
    concept_num = 40           # args.concept_num (small demo)
    num_edge_types = 32        # EdgeEncoder default
    f_num = 1                  # num_features_to_encode
    num_layers = 2             # args.num_gnn_layers
    N, E, B = 24, 48, 2        # nodes, edges, graphs in the batch

    k_param, k_nodes, k_edges, k_eidx = jax.random.split(key, 4)
    params = init_params(k_param, g_dim, concept_num, num_edge_types, f_num, num_layers)
    packed = pack_params(params)   # table/weight padding + bf16 cast done once

    node_ids = jax.random.randint(k_nodes, (N,), 0, concept_num, dtype=jnp.int32)
    edge_attr = jax.random.randint(k_edges, (E, f_num), 0, num_edge_types, dtype=jnp.int32)
    edge_index = jax.random.randint(k_eidx, (2, E), 0, N, dtype=jnp.int32)
    batch = jnp.concatenate([jnp.zeros((N // 2,), jnp.int32),
                             jnp.ones((N - N // 2,), jnp.int32)])

    out = knowmem_forward(packed, node_ids, edge_index, edge_attr, batch, B)
    out = jax.block_until_ready(out)

    ref = reference_forward(params, node_ids, edge_index, edge_attr, batch, B)
    ref = jax.block_until_ready(ref)

    assert out.shape == (B, g_dim)
    err = float(jnp.max(jnp.abs(out - ref)))
    assert jnp.allclose(out, ref, atol=5e-3, rtol=5e-3), f"mismatch vs reference, max abs err {err}"
    print("KERNEL_OK")
</pallas_src>

<mosaic_0001>
module attributes {stable_mosaic.version = 11 : i64} {
  func.func @_embedding_sum_kernel(%arg0: i32, %arg1: memref<24x1xi32, #tpu.memory_space<vmem>>, %arg2: memref<128x128xbf16, #tpu.memory_space<vmem>>, %arg3: memref<24x128xf32, #tpu.memory_space<vmem>>) attributes {dimension_semantics = [#tpu.dimension_semantics<parallel>], iteration_bounds = array<i64: 1>, scalar_prefetch = 0 : i64, scratch_operands = 0 : i64, tpu.core_type = #tpu.core_type<tc>, window_params = [{transform_indices = @transform_0, window_bounds = array<i64: 24, 1>}, {pipeline_mode = #tpu.pipeline_mode<synchronous>, transform_indices = @transform_1, window_bounds = array<i64: 128, 128>}, {transform_indices = @transform_2, window_bounds = array<i64: 24, 128>}]} {
    %0 = tpu.iota {dimensions = array<i32: 1>} : vector<24x128xi32>
    %c0 = arith.constant 0 : index
    %c0_0 = arith.constant 0 : index
    %1 = vector.load %arg1[%c0, %c0_0] : memref<24x1xi32, #tpu.memory_space<vmem>>, vector<24x1xi32>
    %2 = vector.broadcast %1 : vector<24x1xi32> to vector<24x128xi32>
    %3 = arith.cmpi eq, %0, %2 : vector<24x128xi32>
    %4 = arith.extui %3 : vector<24x128xi1> to vector<24x128xi32>
    %5 = arith.sitofp %4 : vector<24x128xi32> to vector<24x128xf32>
    %6 = arith.truncf %5 : vector<24x128xf32> to vector<24x128xbf16>
    %c0_1 = arith.constant 0 : index
    %c0_2 = arith.constant 0 : index
    %7 = vector.load %arg2[%c0_1, %c0_2] : memref<128x128xbf16, #tpu.memory_space<vmem>>, vector<128x128xbf16>
    %cst = arith.constant dense<0.000000e+00> : vector<24x128xf32>
    %8 = tpu.matmul %6, %7, %cst {dimension_numbers = #tpu.dot_dimension_numbers<[1], [0], [0], [1], [0, 0, 1, 1], [], []>} : vector<24x128xbf16>, vector<128x128xbf16>, vector<24x128xf32> -> vector<24x128xf32>
    %c0_3 = arith.constant 0 : index
    %c0_4 = arith.constant 0 : index
    %9 = vector.load %arg3[%c0_3, %c0_4] : memref<24x128xf32, #tpu.memory_space<vmem>>, vector<24x128xf32>
    tpu.vector_store %arg3[%c0_3, %c0_4], %8 {strides = array<i32>} : memref<24x128xf32, #tpu.memory_space<vmem>>, vector<24x128xf32>,
    return
  }
  func.func @transform_0(%arg0: i32) -> (i32, i32) {
    %c0_i32 = arith.constant 0 : i32
    %c0_i32_0 = arith.constant 0 : i32
    return %arg0, %c0_i32 : i32, i32
  }
  func.func @transform_1(%arg0: i32) -> (i32, i32) {
    %c0_i32 = arith.constant 0 : i32
    %c0_i32_0 = arith.constant 0 : i32
    %c0_i32_1 = arith.constant 0 : i32
    return %c0_i32, %c0_i32_0 : i32, i32
  }
  func.func @transform_2(%arg0: i32) -> (i32, i32) {
    %c0_i32 = arith.constant 0 : i32
    %c0_i32_0 = arith.constant 0 : i32
    return %arg0, %c0_i32 : i32, i32
  }
}

</mosaic_0001>

<llo_original>
// kernel: tpu_custom_call.1
$region0: #{tpu_custom_call.1}
  #allocation0 [shape = 'u32[]', space=smem, size = 0x4, offset = 0x4, fixed_abs, tag = 'smem constant byte address 0x4 - core index']
  #allocation1 [shape = 'u32[144,128]{1,0:T(1,128)}', space=vmem, size = 0x12000, scoped, tag = 'internal scratch']
  %s0 = inlined_call_operand.vmem [shape: s32[24,1], index: 0, kind: input, shape index: {}]
  %s1 = inlined_call_operand.hbm [shape: bf16[128,128], index: 1, kind: input, shape index: {}]
  %s2 = inlined_call_operand.hbm [shape: f32[24,128], index: 2, kind: output, shape index: {}]
  %s3 = sld [smem:[#allocation0]]
  $region22: #{tpu_custom_call.1} parent=0
    _
  %s5 = ssub.s32 1, %s3
  %s6 = scalar_select 0, %s5, %s3
  $region1: #{tpu_custom_call.1} parent=0
    #allocation2 [shape = 'u8[32768]{0}', space=vmem, size = 0x8000, scoped, tag = 'input window, operand 1, single buffered']
    #allocation3 [shape = 's32[1]{0}', space=sflag, size = 0x4, scoped, tag = 'scoped memory for tpu_custom_call.1']
    #allocation4 [shape = 's32[1]{0}', space=sflag, size = 0x4, scoped, tag = 'scoped memory for tpu_custom_call.1']
    #allocation5 [shape = 'u8[12288]{0}', space=vmem, size = 0x3000, scoped, tag = 'output window, operand 0, single buffered']
    %7 = vsyncpa [#allocation3], 0
    %8 = vsyncpa [#allocation4], 0
    // Predicated region
    $region2: #{tpu_custom_call.1} parent=1 // pred_check
      _
    $region3: #{tpu_custom_call.1} parent=1 // pred_check_branch
      %10 = sbr.rel (0) target = $region5
    $region4: #{tpu_custom_call.1} parent=1 // pred_region
      _
    $region5: #{tpu_custom_call.1} parent=1 // pred_fallthru
      _
    // Predicated region
    $region6: #{tpu_custom_call.1} parent=1 // pred_check
      _
    $region7: #{tpu_custom_call.1} parent=1 // pred_check_branch
      %12 = sbr.rel (0) target = $region9
    $region8: #{tpu_custom_call.1} parent=1 // pred_region
      %s14 = ssub.s32 1024, 1024
      %15 = vsyncadd [#allocation3], %s14
      %s16 = sshll.u32 [#allocation2], 4
      %s17 = int_to_ptr.vmem [resolvable:$true] %s16
      %22 = dma.hbm_to_vmem [thread:$0]  %s1, 1024, %s17, [#allocation3], 64, 64, 4
    $region9: #{tpu_custom_call.1} parent=1 // pred_fallthru
      _
    // Predicated region
    $region10: #{tpu_custom_call.1} parent=1 // pred_check
      _
    $region11: #{tpu_custom_call.1} parent=1 // pred_check_branch
      %24 = sbr.rel (0) target = $region13
    $region12: #{tpu_custom_call.1} parent=1 // pred_region
      %25 = dma.done [#allocation3], 1024
    $region13: #{tpu_custom_call.1} parent=1 // pred_fallthru
      _
    %v27 = vlaneseq
    %v28 = vand.u32 %v27, 127
    %v29 = vld [vmem:[%s0] sm:$0xff]
    %v30 = vld [vmem:[%s0 + $0x8] sm:$0xff]
    %v31 = vld [vmem:[%s0 + $0x10] sm:$0xff]
    %32 = vset.pattern.permute.xlu0 0
    %33 = vperm.xlu0 %32, %v29
    %v34 = vpop.permute.xlu0 %33
    %35 = vset.pattern.permute.xlu0 0
    %36 = vperm.xlu0 %35, %v30
    %v37 = vpop.permute.xlu0 %36
    %38 = vset.pattern.permute.xlu0 0
    %39 = vperm.xlu0 %38, %v31
    %v40 = vpop.permute.xlu0 %39
    %vm41 = vcmp.eq.s32.totalorder %v28, %v34
    %vm42 = vcmp.eq.s32.totalorder %v28, %v37
    %vm43 = vcmp.eq.s32.totalorder %v28, %v40
    %v44 = vsel %vm41, 1, 0
    %v45 = vsel %vm42, 1, 0
    %v46 = vsel %vm43, 1, 0
    %v47 = vcvt.s32.f32 %v44
    %v48 = vcvt.s32.f32 %v45
    %v49 = vcvt.s32.f32 %v46
    %v50 = vpack.c.bf16 %v48, %v47
    %v51 = vpack.c.bf16 %v49, %v49
    %v52 = vld [vmem:[#allocation2] sm:$0xf]
    %v53 = vld [vmem:[#allocation2 + $0x4] sm:$0xf]
    %v54 = vld [vmem:[#allocation2 + $0x8] sm:$0xf]
    %v55 = vld [vmem:[#allocation2 + $0xc] sm:$0xf]
    %v56 = vld [vmem:[#allocation2 + $0x10] sm:$0xf]
    %v57 = vld [vmem:[#allocation2 + $0x14] sm:$0xf]
    %v58 = vld [vmem:[#allocation2 + $0x18] sm:$0xf]
    %v59 = vld [vmem:[#allocation2 + $0x1c] sm:$0xf]
    %v60 = vld [vmem:[#allocation2 + $0x20] sm:$0xf]
    %v61 = vld [vmem:[#allocation2 + $0x24] sm:$0xf]
    %v62 = vld [vmem:[#allocation2 + $0x28] sm:$0xf]
    %v63 = vld [vmem:[#allocation2 + $0x2c] sm:$0xf]
    %v64 = vld [vmem:[#allocation2 + $0x30] sm:$0xf]
    %v65 = vld [vmem:[#allocation2 + $0x34] sm:$0xf]
    %v66 = vld [vmem:[#allocation2 + $0x38] sm:$0xf]
    %v67 = vld [vmem:[#allocation2 + $0x3c] sm:$0xf]
    %v84 = vunpack.c.l.b16 %v52
    %v85 = vunpack.c.l.b16 %v53
    %v86 = vunpack.c.l.b16 %v54
    %v87 = vunpack.c.l.b16 %v55
    %v88 = vunpack.c.l.b16 %v56
    %v89 = vunpack.c.l.b16 %v57
    %v90 = vunpack.c.l.b16 %v58
    %v91 = vunpack.c.l.b16 %v59
    %v92 = vunpack.c.l.b16 %v60
    %v93 = vunpack.c.l.b16 %v61
    %v94 = vunpack.c.l.b16 %v62
    %v95 = vunpack.c.l.b16 %v63
    %v96 = vunpack.c.l.b16 %v64
    %v97 = vunpack.c.l.b16 %v65
    %v98 = vunpack.c.l.b16 %v66
    %v99 = vunpack.c.l.b16 %v67
    %v100 = vpack.c.b16 %v85, %v84
    %v101 = vpack.c.b16 %v87, %v86
    %v102 = vpack.c.b16 %v89, %v88
    %v103 = vpack.c.b16 %v91, %v90
    %v104 = vpack.c.b16 %v93, %v92
    %v105 = vpack.c.b16 %v95, %v94
    %v106 = vpack.c.b16 %v97, %v96
    %v107 = vpack.c.b16 %v99, %v98
    %116 = vmatprep.subr.bf16.mxu0 0
    %117 = vmatpush1.bf16.msra.mxu0 %v107
    %118 = vmatprep.subr.bf16.mxu0 0
    %119 = vmatpush1.bf16.msra.mxu0 %v106
    %120 = vmatprep.subr.bf16.mxu0 0
    %121 = vmatpush1.bf16.msra.mxu0 %v105
    %122 = vmatprep.subr.bf16.mxu0 0
    %123 = vmatpush1.bf16.msra.mxu0 %v104
    %124 = vmatprep.subr.bf16.mxu0 0
    %125 = vmatpush1.bf16.msra.mxu0 %v103
    %126 = vmatprep.subr.bf16.mxu0 0
    %127 = vmatpush1.bf16.msra.mxu0 %v102
    %128 = vmatprep.subr.bf16.mxu0 0
    %129 = vmatpush1.bf16.msra.mxu0 %v101
    %130 = vmatprep.subr.bf16.mxu0 0
    %131 = vmatpush1.bf16.msra.mxu0 %v100
    %132 = vmatprep.subr.bf16.mxu0 0
    %133 = vmatpush2.bf16.msra.mxu0 0
    %134 = vmatprep.subr.bf16.mxu0 0
    %135 = vmatpush2.bf16.msra.mxu0 0
    %136 = vmatprep.subr.bf16.mxu0 0
    %137 = vmatpush2.bf16.msra.mxu0 0
    %138 = vmatprep.subr.bf16.mxu0 0
    %139 = vmatpush2.bf16.msra.mxu0 0
    %140 = vmatprep.subr.bf16.mxu0 0
    %141 = vmatpush2.bf16.msra.mxu0 0
    %142 = vmatprep.subr.bf16.mxu0 0
    %143 = vmatpush2.bf16.msra.mxu0 0
    %144 = vmatprep.subr.bf16.mxu0 0
    %145 = vmatpush2.bf16.msra.mxu0 0
    %146 = vmatprep.subr.bf16.mxu0 0
    %147 = vmatpush2.bf16.msra.mxu0 0
    %148 = vmatprep.mubr.bf16.mxu0 0
    %149 = vmatmul.mubr.bf16.gmra.mxu0 %v50
    %v150 = vpop.f32.mrf.mxu0
    %v151 = vadd.f32 0.0, %v150
    %v152 = vpop.f32.mrf.mxu0
    %v153 = vpop.f32.mrf.mxu0
    %v154 = vadd.f32 0.0, %v153
    %v155 = vpop.f32.mrf.mxu0
    %156 = vmatprep.mubr.bf16.mxu0 0
    %157 = vmatmul.mubr.bf16.gmra.mxu0 %v51
    %v158 = vpop.f32.mrf.mxu0
    %v159 = vadd.f32 0.0, %v158
    %v160 = vpop.f32.mrf.mxu0
    %v161 = vpop.f32.mrf.mxu0
    %v162 = vpop.f32.mrf.mxu0
    %163 = vdwg.mxu0
    %164 = vst [vmem:[#allocation5] sm:$0xff] %v151
    %165 = vst [vmem:[#allocation5 + $0x8] sm:$0xff] %v154
    %166 = vst [vmem:[#allocation5 + $0x10] sm:$0xff] %v159
    // Predicated region
    $region14: #{tpu_custom_call.1} parent=1 // pred_check
      _
    $region15: #{tpu_custom_call.1} parent=1 // pred_check_branch
      %168 = sbr.rel (0) target = $region17
    $region16: #{tpu_custom_call.1} parent=1 // pred_region
      %s170 = ssub.s32 384, 384
      %171 = vsyncadd [#allocation4], %s170
      %s172 = sshll.u32 [#allocation5], 4
      %s173 = int_to_ptr.vmem [resolvable:$true] %s172
      %178 = dma.vmem_to_hbm [thread:$0]  %s173, 384, %s2, [#allocation4], 128, 128, 8
    $region17: #{tpu_custom_call.1} parent=1 // pred_fallthru
      _
    // Predicated region
    $region18: #{tpu_custom_call.1} parent=1 // pred_check
      _
    $region19: #{tpu_custom_call.1} parent=1 // pred_check_branch
      %180 = sbr.rel (0) target = $region21
    $region20: #{tpu_custom_call.1} parent=1 // pred_region
      %181 = dma.done [#allocation4], 384
    $region21: #{tpu_custom_call.1} parent=1 // pred_fallthru
      _
    %182 = vsyncpa [#allocation3], 1
    %183 = vsyncpa [#allocation4], 1

</llo_original>
